<compile_context>
chip_gen: v7x
topology: tpu7x:2x2x1
jax: 0.10.0
libtpu: 0.0.40
codegen_flags: <defaults>
</compile_context>

<pallas_src>
import math

import jax
import jax.numpy as jnp
from jax.experimental import pallas as pl
from jax.experimental.pallas import tpu as pltpu

HIDDEN = 512


def _round_up(x, m):
    return (x + m - 1) // m * m


def _slab_layout(d, hidden=HIDDEN):
    """Static row/col offsets of each parameter inside the packed slab."""
    wqkv_row0 = _round_up(d + 4, 8)
    n_rows = _round_up(wqkv_row0 + d, 8)
    n_cols = max(hidden, _round_up(3 * d, 128))
    return dict(
        w1=(0, d),                         # rows [0, D), cols [0, 512)
        b1=d,                              # row D
        w2=d + 1,                          # row D+1 (fc2 weight as a lane-dense row)
        bqkv=d + 2,                        # row D+2, cols [0, 3D)
        b2=d + 3,                          # row D+3, col 0
        wqkv=(wqkv_row0, wqkv_row0 + d),   # rows, cols [0, 3D)
        shape=(n_rows, n_cols),
    )


def _fast_recip(x):
    # EUP approximate reciprocal (vrcp) + one Newton-Raphson step: relative
    # error goes eps -> eps^2, well inside the 1e-4 tolerance.
    inv = pl.reciprocal(x, approx=True)
    return inv * (2.0 - x * inv)


def attention_module_kernel(
    x_ref,      # (3N, D)   stacked [x1; x2; x3]
    slab_ref,   # (72, 512) packed parameters (see _slab_layout)
    o_ref,      # (N, D)
):
    n = o_ref.shape[0]
    d = o_ref.shape[1]
    lay = _slab_layout(d)

    x = x_ref[...]                                               # (3N, D)

    # ---- static (zero-cost) views into the packed parameter slab -----------
    w1 = slab_ref[lay["w1"][0]:lay["w1"][1], :]                  # (D, 512)
    b1 = slab_ref[lay["b1"]:lay["b1"] + 1, :]                    # (1, 512)
    w2 = slab_ref[lay["w2"]:lay["w2"] + 1, :]                    # (1, 512)
    bqkv = slab_ref[lay["bqkv"]:lay["bqkv"] + 1, 0:3 * d]        # (1, 3D)
    b2 = slab_ref[lay["b2"]:lay["b2"] + 1, 0:1]                  # (1, 1)
    wqkv = slab_ref[lay["wqkv"][0]:lay["wqkv"][1], 0:3 * d]      # (D, 3D)

    # ---- fused QKV projection: one MXU pass (1/sqrt(D) pre-folded into Wq) --
    qkv = jnp.dot(x, wqkv, preferred_element_type=jnp.float32) + bqkv  # (3N, 3D)
    q = qkv[:, 0:d]
    k = qkv[:, d:2 * d]
    v = qkv[:, 2 * d:3 * d]

    q1, q2, q3 = q[0:n], q[n:2 * n], q[2 * n:3 * n]
    k1, k2, k3 = k[0:n], k[n:2 * n], k[2 * n:3 * n]
    v1, v2, v3 = v[0:n], v[n:2 * n], v[2 * n:3 * n]

    # ---- cross attention (q @ k^T via dot_general; scale already folded) ---
    def cross_attn(qq, kk, vv):
        s = jax.lax.dot_general(
            qq, kk, (((1,), (1,)), ((), ())),
            preferred_element_type=jnp.float32,
        )                                                        # (N, N)
        s = s - jnp.max(s, axis=-1, keepdims=True)
        p = jnp.exp(s)
        p = p * _fast_recip(jnp.sum(p, axis=-1, keepdims=True))
        return jnp.dot(p, vv, preferred_element_type=jnp.float32)

    out1 = cross_attn(q1, k2, v2)        # x1 attends to x2
    out2 = cross_attn(q2, k3, v3)        # x2 attends to x3
    out3 = cross_attn(q3, k1, v1)        # x3 attends to x1

    # ---- batched scoring MLP: one (3N,D)@(D,512) matmul + ReLU --------------
    o_all = jnp.concatenate([out1, out2, out3], axis=0)          # (3N, D)
    h = jnp.maximum(
        jnp.dot(o_all, w1, preferred_element_type=jnp.float32) + b1, 0.0
    )                                                            # (3N, 512)
    # fc2 as lane-dense VPU multiply + XLU reduce (no 1-lane-wide matmul).
    a_all = jnp.sum(h * w2, axis=-1, keepdims=True) + b2         # (3N, 1)

    a1, a2, a3 = a_all[0:n], a_all[n:2 * n], a_all[2 * n:3 * n]

    # ---- 3-way gating softmax without concatenate / slicing relayouts ------
    m = jnp.maximum(jnp.maximum(a1, a2), a3)
    e1 = jnp.exp(a1 - m)
    e2 = jnp.exp(a2 - m)
    e3 = jnp.exp(a3 - m)
    inv = _fast_recip(e1 + e2 + e3)

    x1, x2, x3 = x[0:n], x[n:2 * n], x[2 * n:3 * n]
    o_ref[...] = (
        (e1 * inv) * x1 + (e2 * inv) * x2 + (e3 * inv) * x3
    ).astype(o_ref.dtype)


def pack_params(p):
    """One-time parameter prep: fuse QKV, fold 1/sqrt(D) into Wq/bq, pack slab."""
    d = p["wq"].shape[0]
    lay = _slab_layout(d)
    scale = 1.0 / math.sqrt(d)
    wqkv = jnp.concatenate([p["wq"] * scale, p["wk"], p["wv"]], axis=1)  # (D, 3D)
    bqkv = jnp.concatenate([p["bq"] * scale, p["bk"], p["bv"]], axis=1)  # (1, 3D)

    slab = jnp.zeros(lay["shape"], jnp.float32)
    slab = slab.at[lay["w1"][0]:lay["w1"][1], :HIDDEN].set(p["w1"])
    slab = slab.at[lay["b1"], :HIDDEN].set(p["b1"][0])
    slab = slab.at[lay["w2"], :HIDDEN].set(p["w2"][:, 0])
    slab = slab.at[lay["bqkv"], 0:3 * d].set(bqkv[0])
    slab = slab.at[lay["b2"], 0].set(p["b2"][0, 0])
    slab = slab.at[lay["wqkv"][0]:lay["wqkv"][1], 0:3 * d].set(wqkv)
    return slab


@jax.jit
def attention_module_forward(x1, x2, x3, slab):
    n, d = x1.shape
    x = jnp.concatenate([x1, x2, x3], axis=0)        # (3N, D), only data-dependent prep
    vmem = pl.BlockSpec(memory_space=pltpu.MemorySpace.VMEM)
    return pl.pallas_call(
        attention_module_kernel,
        out_shape=jax.ShapeDtypeStruct((n, d), jnp.float32),
        in_specs=[vmem, vmem],
        out_specs=vmem,
    )(x, slab)


def init_params(key, input_size, hidden=HIDDEN):
    # Deterministic synthetic init (uniform fan-in scaling, torch-like).
    ks = jax.random.split(key, 10)

    def lin(kw, kb, fan_in, fan_out):
        bound = 1.0 / math.sqrt(fan_in)
        # weight stored pre-transposed as (in, out) for x @ W
        w = jax.random.uniform(kw, (fan_in, fan_out), jnp.float32, -bound, bound)
        b = jax.random.uniform(kb, (1, fan_out), jnp.float32, -bound, bound)
        return w, b

    wq, bq = lin(ks[0], ks[1], input_size, input_size)
    wk, bk = lin(ks[2], ks[3], input_size, input_size)
    wv, bv = lin(ks[4], ks[5], input_size, input_size)
    w1, b1 = lin(ks[6], ks[7], input_size, hidden)
    w2, b2 = lin(ks[8], ks[9], hidden, 1)
    return dict(wq=wq, bq=bq, wk=wk, bk=bk, wv=wv, bv=bv,
                w1=w1, b1=b1, w2=w2, b2=b2)


def reference_forward(x1, x2, x3, p):
    # Pure-JAX reference mirroring the PyTorch forward.
    D = x1.shape[-1]

    def qkv(x):
        return x @ p["wq"] + p["bq"], x @ p["wk"] + p["bk"], x @ p["wv"] + p["bv"]

    q1, k1, v1 = qkv(x1)
    q2, k2, v2 = qkv(x2)
    q3, k3, v3 = qkv(x3)

    def attn(q, k, v):
        s = (q @ k.T) / math.sqrt(D)
        return jax.nn.softmax(s, axis=-1) @ v

    o1, o2, o3 = attn(q1, k2, v2), attn(q2, k3, v3), attn(q3, k1, v1)

    def score(o):
        return jnp.maximum(o @ p["w1"] + p["b1"], 0.0) @ p["w2"] + p["b2"]

    a = jnp.concatenate([score(o1), score(o2), score(o3)], axis=1)
    w = jax.nn.softmax(a, axis=1)
    return w[:, 0:1] * x1 + w[:, 1:2] * x2 + w[:, 2:3] * x3


if __name__ == "__main__":
    N, D = 8, 32  # batch of 8 vectors, input_size = 32

    key = jax.random.PRNGKey(0)
    kx1, kx2, kx3, kp = jax.random.split(key, 4)
    x1 = jax.random.normal(kx1, (N, D), jnp.float32)
    x2 = jax.random.normal(kx2, (N, D), jnp.float32)
    x3 = jax.random.normal(kx3, (N, D), jnp.float32)
    params = init_params(kp, D)

    # One-time parameter prep (hoisted out of the per-call jitted forward).
    slab = jax.block_until_ready(pack_params(params))

    out = attention_module_forward(x1, x2, x3, slab)
    out = jax.block_until_ready(out)

    ref = reference_forward(x1, x2, x3, params)
    assert out.shape == (N, D)
    assert jnp.allclose(out, ref, atol=1e-4, rtol=1e-4), "mismatch vs reference"

    print("KERNEL_OK")
</pallas_src>

<mosaic_0001>
module attributes {stable_mosaic.version = 11 : i64} {
  func.func @attention_module_kernel(%arg0: memref<24x32xf32, #tpu.memory_space<vmem>>, %arg1: memref<72x512xf32, #tpu.memory_space<vmem>>, %arg2: memref<8x32xf32, #tpu.memory_space<vmem>>) attributes {dimension_semantics = [], scalar_prefetch = 0 : i64, scratch_operands = 0 : i64, tpu.core_type = #tpu.core_type<tc>} {
    %c0 = arith.constant 0 : index
    %c0_0 = arith.constant 0 : index
    %0 = vector.load %arg0[%c0, %c0_0] : memref<24x32xf32, #tpu.memory_space<vmem>>, vector<24x32xf32>
    %c0_1 = arith.constant 0 : index
    %c0_2 = arith.constant 0 : index
    %1 = vector.load %arg1[%c0_1, %c0_2] : memref<72x512xf32, #tpu.memory_space<vmem>>, vector<32x512xf32>
    %c32 = arith.constant 32 : index
    %c0_3 = arith.constant 0 : index
    %2 = vector.load %arg1[%c32, %c0_3] : memref<72x512xf32, #tpu.memory_space<vmem>>, vector<1x512xf32>
    %c33 = arith.constant 33 : index
    %c0_4 = arith.constant 0 : index
    %3 = vector.load %arg1[%c33, %c0_4] : memref<72x512xf32, #tpu.memory_space<vmem>>, vector<1x512xf32>
    %c34 = arith.constant 34 : index
    %c0_5 = arith.constant 0 : index
    %4 = vector.load %arg1[%c34, %c0_5] : memref<72x512xf32, #tpu.memory_space<vmem>>, vector<1x96xf32>
    %c35 = arith.constant 35 : index
    %c0_6 = arith.constant 0 : index
    %5 = vector.load %arg1[%c35, %c0_6] : memref<72x512xf32, #tpu.memory_space<vmem>>, vector<1x1xf32>
    %c40 = arith.constant 40 : index
    %c0_7 = arith.constant 0 : index
    %6 = vector.load %arg1[%c40, %c0_7] : memref<72x512xf32, #tpu.memory_space<vmem>>, vector<32x96xf32>
    %cst = arith.constant dense<0.000000e+00> : vector<24x96xf32>
    %7 = tpu.matmul %0, %6, %cst {dimension_numbers = #tpu.dot_dimension_numbers<[1], [0], [0], [1], [0, 0, 1, 1], [], []>} : vector<24x32xf32>, vector<32x96xf32>, vector<24x96xf32> -> vector<24x96xf32>
    %8 = vector.broadcast %4 : vector<1x96xf32> to vector<24x96xf32>
    %9 = arith.addf %7, %8 : vector<24x96xf32>
    %10 = vector.extract_strided_slice %9 {offsets = [0, 0], sizes = [24, 32], strides = [1, 1]} : vector<24x96xf32> to vector<24x32xf32>
    %11 = vector.extract_strided_slice %9 {offsets = [0, 32], sizes = [24, 32], strides = [1, 1]} : vector<24x96xf32> to vector<24x32xf32>
    %12 = vector.extract_strided_slice %9 {offsets = [0, 64], sizes = [24, 32], strides = [1, 1]} : vector<24x96xf32> to vector<24x32xf32>
    %13 = vector.extract_strided_slice %10 {offsets = [0, 0], sizes = [8, 32], strides = [1, 1]} : vector<24x32xf32> to vector<8x32xf32>
    %14 = vector.extract_strided_slice %10 {offsets = [8, 0], sizes = [8, 32], strides = [1, 1]} : vector<24x32xf32> to vector<8x32xf32>
    %15 = vector.extract_strided_slice %10 {offsets = [16, 0], sizes = [8, 32], strides = [1, 1]} : vector<24x32xf32> to vector<8x32xf32>
    %16 = vector.extract_strided_slice %11 {offsets = [0, 0], sizes = [8, 32], strides = [1, 1]} : vector<24x32xf32> to vector<8x32xf32>
    %17 = vector.extract_strided_slice %11 {offsets = [8, 0], sizes = [8, 32], strides = [1, 1]} : vector<24x32xf32> to vector<8x32xf32>
    %18 = vector.extract_strided_slice %11 {offsets = [16, 0], sizes = [8, 32], strides = [1, 1]} : vector<24x32xf32> to vector<8x32xf32>
    %19 = vector.extract_strided_slice %12 {offsets = [0, 0], sizes = [8, 32], strides = [1, 1]} : vector<24x32xf32> to vector<8x32xf32>
    %20 = vector.extract_strided_slice %12 {offsets = [8, 0], sizes = [8, 32], strides = [1, 1]} : vector<24x32xf32> to vector<8x32xf32>
    %21 = vector.extract_strided_slice %12 {offsets = [16, 0], sizes = [8, 32], strides = [1, 1]} : vector<24x32xf32> to vector<8x32xf32>
    %cst_8 = arith.constant dense<0.000000e+00> : vector<8x8xf32>
    %22 = tpu.matmul %13, %17, %cst_8 {dimension_numbers = #tpu.dot_dimension_numbers<[1], [1], [0], [0], [0, 0, 1, 0], [], []>} : vector<8x32xf32>, vector<8x32xf32>, vector<8x8xf32> -> vector<8x8xf32>
    %cst_9 = arith.constant dense<0xFF800000> : vector<8xf32>
    %23 = vector.multi_reduction <maximumf>, %22, %cst_9 [1] : vector<8x8xf32> to vector<8xf32>
    %24 = vector.shape_cast %23 : vector<8xf32> to vector<8x1xf32>
    %25 = vector.broadcast %24 : vector<8x1xf32> to vector<8x8xf32>
    %26 = arith.subf %22, %25 : vector<8x8xf32>
    %27 = math.exp %26 : vector<8x8xf32>
    %cst_10 = arith.constant dense<0.000000e+00> : vector<8xf32>
    %28 = vector.multi_reduction <add>, %27, %cst_10 [1] : vector<8x8xf32> to vector<8xf32>
    %29 = vector.shape_cast %28 : vector<8xf32> to vector<8x1xf32>
    %30 = tpu.reciprocal %29 {approx = true} : vector<8x1xf32> -> vector<8x1xf32>
    %31 = arith.mulf %29, %30 : vector<8x1xf32>
    %cst_11 = arith.constant 2.000000e+00 : f32
    %32 = vector.broadcast %cst_11 : f32 to vector<8x1xf32>
    %33 = arith.subf %32, %31 : vector<8x1xf32>
    %34 = arith.mulf %30, %33 : vector<8x1xf32>
    %35 = vector.broadcast %34 : vector<8x1xf32> to vector<8x8xf32>
    %36 = arith.mulf %27, %35 : vector<8x8xf32>
    %cst_12 = arith.constant dense<0.000000e+00> : vector<8x32xf32>
    %37 = tpu.matmul %36, %20, %cst_12 {dimension_numbers = #tpu.dot_dimension_numbers<[1], [0], [0], [1], [0, 0, 1, 1], [], []>} : vector<8x8xf32>, vector<8x32xf32>, vector<8x32xf32> -> vector<8x32xf32>
    %cst_13 = arith.constant dense<0.000000e+00> : vector<8x8xf32>
    %38 = tpu.matmul %14, %18, %cst_13 {dimension_numbers = #tpu.dot_dimension_numbers<[1], [1], [0], [0], [0, 0, 1, 0], [], []>} : vector<8x32xf32>, vector<8x32xf32>, vector<8x8xf32> -> vector<8x8xf32>
    %cst_14 = arith.constant dense<0xFF800000> : vector<8xf32>
    %39 = vector.multi_reduction <maximumf>, %38, %cst_14 [1] : vector<8x8xf32> to vector<8xf32>
    %40 = vector.shape_cast %39 : vector<8xf32> to vector<8x1xf32>
    %41 = vector.broadcast %40 : vector<8x1xf32> to vector<8x8xf32>
    %42 = arith.subf %38, %41 : vector<8x8xf32>
    %43 = math.exp %42 : vector<8x8xf32>
    %cst_15 = arith.constant dense<0.000000e+00> : vector<8xf32>
    %44 = vector.multi_reduction <add>, %43, %cst_15 [1] : vector<8x8xf32> to vector<8xf32>
    %45 = vector.shape_cast %44 : vector<8xf32> to vector<8x1xf32>
    %46 = tpu.reciprocal %45 {approx = true} : vector<8x1xf32> -> vector<8x1xf32>
    %47 = arith.mulf %45, %46 : vector<8x1xf32>
    %cst_16 = arith.constant 2.000000e+00 : f32
    %48 = vector.broadcast %cst_16 : f32 to vector<8x1xf32>
    %49 = arith.subf %48, %47 : vector<8x1xf32>
    %50 = arith.mulf %46, %49 : vector<8x1xf32>
    %51 = vector.broadcast %50 : vector<8x1xf32> to vector<8x8xf32>
    %52 = arith.mulf %43, %51 : vector<8x8xf32>
    %cst_17 = arith.constant dense<0.000000e+00> : vector<8x32xf32>
    %53 = tpu.matmul %52, %21, %cst_17 {dimension_numbers = #tpu.dot_dimension_numbers<[1], [0], [0], [1], [0, 0, 1, 1], [], []>} : vector<8x8xf32>, vector<8x32xf32>, vector<8x32xf32> -> vector<8x32xf32>
    %cst_18 = arith.constant dense<0.000000e+00> : vector<8x8xf32>
    %54 = tpu.matmul %15, %16, %cst_18 {dimension_numbers = #tpu.dot_dimension_numbers<[1], [1], [0], [0], [0, 0, 1, 0], [], []>} : vector<8x32xf32>, vector<8x32xf32>, vector<8x8xf32> -> vector<8x8xf32>
    %cst_19 = arith.constant dense<0xFF800000> : vector<8xf32>
    %55 = vector.multi_reduction <maximumf>, %54, %cst_19 [1] : vector<8x8xf32> to vector<8xf32>
    %56 = vector.shape_cast %55 : vector<8xf32> to vector<8x1xf32>
    %57 = vector.broadcast %56 : vector<8x1xf32> to vector<8x8xf32>
    %58 = arith.subf %54, %57 : vector<8x8xf32>
    %59 = math.exp %58 : vector<8x8xf32>
    %cst_20 = arith.constant dense<0.000000e+00> : vector<8xf32>
    %60 = vector.multi_reduction <add>, %59, %cst_20 [1] : vector<8x8xf32> to vector<8xf32>
    %61 = vector.shape_cast %60 : vector<8xf32> to vector<8x1xf32>
    %62 = tpu.reciprocal %61 {approx = true} : vector<8x1xf32> -> vector<8x1xf32>
    %63 = arith.mulf %61, %62 : vector<8x1xf32>
    %cst_21 = arith.constant 2.000000e+00 : f32
    %64 = vector.broadcast %cst_21 : f32 to vector<8x1xf32>
    %65 = arith.subf %64, %63 : vector<8x1xf32>
    %66 = arith.mulf %62, %65 : vector<8x1xf32>
    %67 = vector.broadcast %66 : vector<8x1xf32> to vector<8x8xf32>
    %68 = arith.mulf %59, %67 : vector<8x8xf32>
    %cst_22 = arith.constant dense<0.000000e+00> : vector<8x32xf32>
    %69 = tpu.matmul %68, %19, %cst_22 {dimension_numbers = #tpu.dot_dimension_numbers<[1], [0], [0], [1], [0, 0, 1, 1], [], []>} : vector<8x8xf32>, vector<8x32xf32>, vector<8x32xf32> -> vector<8x32xf32>
    %70 = tpu.concatenate %37, %53, %69 in 0 : vector<8x32xf32>, vector<8x32xf32>, vector<8x32xf32> -> vector<24x32xf32>
    %cst_23 = arith.constant dense<0.000000e+00> : vector<24x512xf32>
    %71 = tpu.matmul %70, %1, %cst_23 {dimension_numbers = #tpu.dot_dimension_numbers<[1], [0], [0], [1], [0, 0, 1, 1], [], []>} : vector<24x32xf32>, vector<32x512xf32>, vector<24x512xf32> -> vector<24x512xf32>
    %72 = vector.broadcast %2 : vector<1x512xf32> to vector<24x512xf32>
    %73 = arith.addf %71, %72 : vector<24x512xf32>
    %cst_24 = arith.constant 0.000000e+00 : f32
    %74 = vector.broadcast %cst_24 : f32 to vector<24x512xf32>
    %75 = arith.maximumf %73, %74 : vector<24x512xf32>
    %76 = vector.broadcast %3 : vector<1x512xf32> to vector<24x512xf32>
    %77 = arith.mulf %75, %76 : vector<24x512xf32>
    %cst_25 = arith.constant dense<0.000000e+00> : vector<24xf32>
    %78 = vector.multi_reduction <add>, %77, %cst_25 [1] : vector<24x512xf32> to vector<24xf32>
    %79 = vector.shape_cast %78 : vector<24xf32> to vector<24x1xf32>
    %80 = vector.broadcast %5 : vector<1x1xf32> to vector<24x1xf32>
    %81 = arith.addf %79, %80 : vector<24x1xf32>
    %82 = vector.extract_strided_slice %81 {offsets = [0, 0], sizes = [8, 1], strides = [1, 1]} : vector<24x1xf32> to vector<8x1xf32>
    %83 = vector.extract_strided_slice %81 {offsets = [8, 0], sizes = [8, 1], strides = [1, 1]} : vector<24x1xf32> to vector<8x1xf32>
    %84 = vector.extract_strided_slice %81 {offsets = [16, 0], sizes = [8, 1], strides = [1, 1]} : vector<24x1xf32> to vector<8x1xf32>
    %85 = arith.maximumf %82, %83 : vector<8x1xf32>
    %86 = arith.maximumf %85, %84 : vector<8x1xf32>
    %87 = arith.subf %82, %86 : vector<8x1xf32>
    %88 = math.exp %87 : vector<8x1xf32>
    %89 = arith.subf %83, %86 : vector<8x1xf32>
    %90 = math.exp %89 : vector<8x1xf32>
    %91 = arith.subf %84, %86 : vector<8x1xf32>
    %92 = math.exp %91 : vector<8x1xf32>
    %93 = arith.addf %88, %90 : vector<8x1xf32>
    %94 = arith.addf %93, %92 : vector<8x1xf32>
    %95 = tpu.reciprocal %94 {approx = true} : vector<8x1xf32> -> vector<8x1xf32>
    %96 = arith.mulf %94, %95 : vector<8x1xf32>
    %cst_26 = arith.constant 2.000000e+00 : f32
    %97 = vector.broadcast %cst_26 : f32 to vector<8x1xf32>
    %98 = arith.subf %97, %96 : vector<8x1xf32>
    %99 = arith.mulf %95, %98 : vector<8x1xf32>
    %100 = vector.extract_strided_slice %0 {offsets = [0, 0], sizes = [8, 32], strides = [1, 1]} : vector<24x32xf32> to vector<8x32xf32>
    %101 = vector.extract_strided_slice %0 {offsets = [8, 0], sizes = [8, 32], strides = [1, 1]} : vector<24x32xf32> to vector<8x32xf32>
    %102 = vector.extract_strided_slice %0 {offsets = [16, 0], sizes = [8, 32], strides = [1, 1]} : vector<24x32xf32> to vector<8x32xf32>
    %103 = arith.mulf %88, %99 : vector<8x1xf32>
    %104 = vector.broadcast %103 : vector<8x1xf32> to vector<8x32xf32>
    %105 = arith.mulf %104, %100 : vector<8x32xf32>
    %106 = arith.mulf %90, %99 : vector<8x1xf32>
    %107 = vector.broadcast %106 : vector<8x1xf32> to vector<8x32xf32>
    %108 = arith.mulf %107, %101 : vector<8x32xf32>
    %109 = arith.addf %105, %108 : vector<8x32xf32>
    %110 = arith.mulf %92, %99 : vector<8x1xf32>
    %111 = vector.broadcast %110 : vector<8x1xf32> to vector<8x32xf32>
    %112 = arith.mulf %111, %102 : vector<8x32xf32>
    %113 = arith.addf %109, %112 : vector<8x32xf32>
    %c0_27 = arith.constant 0 : index
    %c0_28 = arith.constant 0 : index
    %114 = vector.load %arg2[%c0_27, %c0_28] : memref<8x32xf32, #tpu.memory_space<vmem>>, vector<8x32xf32>
    tpu.vector_store %arg2[%c0_27, %c0_28], %113 {strides = array<i32>} : memref<8x32xf32, #tpu.memory_space<vmem>>, vector<8x32xf32>,
    return
  }
}

</mosaic_0001>

<llo_original>
// kernel: attention_module_forward.1
$region0: #{attention_module_forward.1}
  #allocation0 [shape = 'u32[]', space=smem, size = 0x4, offset = 0x4, fixed_abs, tag = 'smem constant byte address 0x4 - core index']
  #allocation1 [shape = 'u32[144,128]{1,0:T(1,128)}', space=vmem, size = 0x12000, scoped, tag = 'internal scratch']
  %s0 = inlined_call_operand.vmem [shape: f32[24,32], index: 0, kind: input, shape index: {}]
  %s1 = inlined_call_operand.hbm [shape: f32[72,512], index: 1, kind: input, shape index: {}]
  %s2 = inlined_call_operand.hbm [shape: f32[8,32], index: 2, kind: output, shape index: {}]
  %s3 = sld [smem:[#allocation0]]
  $region22: #{attention_module_forward.1} parent=0
    _
  %s5 = ssub.s32 1, %s3
  %s6 = scalar_select 0, %s5, %s3
  $region1: #{attention_module_forward.1} parent=0
    #allocation2 [shape = 'u8[147456]{0}', space=vmem, size = 0x24000, scoped, tag = 'input window, operand 1, single buffered']
    #allocation3 [shape = 's32[1]{0}', space=sflag, size = 0x4, scoped, tag = 'scoped memory for attention_module_forward.1']
    #allocation4 [shape = 's32[1]{0}', space=sflag, size = 0x4, scoped, tag = 'scoped memory for attention_module_forward.1']
    #allocation5 [shape = 'u8[4096]{0}', space=vmem, size = 0x1000, scoped, tag = 'output window, operand 0, single buffered']
    %7 = vsyncpa [#allocation3], 0
    %8 = vsyncpa [#allocation4], 0
    // Predicated region
    $region2: #{attention_module_forward.1} parent=1 // pred_check
      _
    $region3: #{attention_module_forward.1} parent=1 // pred_check_branch
      %10 = sbr.rel (0) target = $region5
    $region4: #{attention_module_forward.1} parent=1 // pred_region
      _
    $region5: #{attention_module_forward.1} parent=1 // pred_fallthru
      _
    // Predicated region
    $region6: #{attention_module_forward.1} parent=1 // pred_check
      _
    $region7: #{attention_module_forward.1} parent=1 // pred_check_branch
      %12 = sbr.rel (0) target = $region9
    $region8: #{attention_module_forward.1} parent=1 // pred_region
      %s14 = ssub.s32 4608, 4608
      %15 = vsyncadd [#allocation3], %s14
      %s16 = sshll.u32 [#allocation2], 4
      %s17 = int_to_ptr.vmem [resolvable:$true] %s16
      %22 = dma.hbm_to_vmem [thread:$0]  %s1, 4608, %s17, [#allocation3], 512, 512, 32
    $region9: #{attention_module_forward.1} parent=1 // pred_fallthru
      _
    // Predicated region
    $region10: #{attention_module_forward.1} parent=1 // pred_check
      _
    $region11: #{attention_module_forward.1} parent=1 // pred_check_branch
      %24 = sbr.rel (0) target = $region13
    $region12: #{attention_module_forward.1} parent=1 // pred_region
      %25 = dma.done [#allocation3], 4608
    $region13: #{attention_module_forward.1} parent=1 // pred_fallthru
      _
    %v26 = vld [vmem:[%s0] sm:$0xff]
    %v27 = vld [vmem:[%s0 + $0x8] sm:$0xff]
    %v28 = vld [vmem:[%s0 + $0x10] sm:$0xff]
    %v29 = vld [vmem:[#allocation2] sm:$0xff]
    %v30 = vld [vmem:[#allocation2 + $0x8] sm:$0xff]
    %v31 = vld [vmem:[#allocation2 + $0x10] sm:$0xff]
    %v32 = vld [vmem:[#allocation2 + $0x18] sm:$0xff]
    %v33 = vld [vmem:[#allocation2 + $0x20] sm:$0xff]
    %v34 = vld [vmem:[#allocation2 + $0x28] sm:$0xff]
    %v35 = vld [vmem:[#allocation2 + $0x30] sm:$0xff]
    %v36 = vld [vmem:[#allocation2 + $0x38] sm:$0xff]
    %v37 = vld [vmem:[#allocation2 + $0x40] sm:$0xff]
    %v38 = vld [vmem:[#allocation2 + $0x48] sm:$0xff]
    %v39 = vld [vmem:[#allocation2 + $0x50] sm:$0xff]
    %v40 = vld [vmem:[#allocation2 + $0x58] sm:$0xff]
    %v41 = vld [vmem:[#allocation2 + $0x60] sm:$0xff]
    %v42 = vld [vmem:[#allocation2 + $0x68] sm:$0xff]
    %v43 = vld [vmem:[#allocation2 + $0x70] sm:$0xff]
    %v44 = vld [vmem:[#allocation2 + $0x78] sm:$0xff]
    %s45 = scalar_lea.vmem [#allocation2], 128
    %v46 = vld [vmem:[%s45] ss:$8 sm:$0xf]
    %s47 = scalar_lea.vmem [#allocation2], 129
    %v48 = vld [vmem:[%s47] ss:$8 sm:$0xf]
    %v49 = vld [vmem:[#allocation2 + $0x82] ss:$0 sm:$0xff]
    %v50 = vld [vmem:[#allocation2 + $0x83] ss:$0 sm:$0xff]
    %v51 = vld [vmem:[#allocation2 + $0xa0] sm:$0xff]
    %v52 = vld [vmem:[#allocation2 + $0xc0] sm:$0xff]
    %v53 = vld [vmem:[#allocation2 + $0xe0] sm:$0xff]
    %v54 = vld [vmem:[#allocation2 + $0x100] sm:$0xff]
    %vm55 = vcmask 261120
    %v57 = vsel %vm55, %v26, 0
    %v60 = vsel %vm55, %v27, 0
    %v63 = vsel %vm55, %v28, 0
    %65 = vmatprep.subr.mxu0 0.0
    %66 = vmatpush1.msra.mxu0 %v51
    %67 = vmatprep.subr.mxu0 0.0
    %68 = vmatpush1.msra.mxu0 %v52
    %69 = vmatprep.subr.mxu0 0.0
    %70 = vmatpush1.msra.mxu0 %v53
    %71 = vmatprep.subr.mxu0 0.0
    %72 = vmatpush1.msra.mxu0 %v54
    %73 = vmatprep.subr.mxu0 0.0
    %74 = vmatpush1.msra.mxu0 0.0
    %75 = vmatprep.subr.mxu0 0.0
    %76 = vmatpush1.msra.mxu0 0.0
    %77 = vmatprep.subr.mxu0 0.0
    %78 = vmatpush1.msra.mxu0 0.0
    %79 = vmatprep.subr.mxu0 0.0
    %80 = vmatpush1.msra.mxu0 0.0
    %81 = vmatprep.subr.mxu0 0.0
    %82 = vmatpush1.msra.mxu0 0.0
    %83 = vmatprep.subr.mxu0 0.0
    %84 = vmatpush1.msra.mxu0 0.0
    %85 = vmatprep.subr.mxu0 0.0
    %86 = vmatpush1.msra.mxu0 0.0
    %87 = vmatprep.subr.mxu0 0.0
    %88 = vmatpush1.msra.mxu0 0.0
    %89 = vmatprep.subr.mxu0 0.0
    %90 = vmatpush1.msra.mxu0 0.0
    %91 = vmatprep.subr.mxu0 0.0
    %92 = vmatpush1.msra.mxu0 0.0
    %93 = vmatprep.subr.mxu0 0.0
    %94 = vmatpush1.msra.mxu0 0.0
    %95 = vmatprep.subr.mxu0 0.0
    %96 = vmatpush1.msra.mxu0 0.0
    %97 = vmatprep.subr.mxu0 0.0
    %98 = vmatpush1.msra.mxu0 0.0
    %99 = vmatprep.subr.mxu0 0.0
    %100 = vmatpush1.msra.mxu0 0.0
    %101 = vmatprep.subr.mxu0 0.0
    %102 = vmatpush1.msra.mxu0 0.0
    %103 = vmatprep.subr.mxu0 0.0
    %104 = vmatpush1.msra.mxu0 0.0
    %105 = vmatprep.subr.mxu0 0.0
    %106 = vmatpush1.msra.mxu0 0.0
    %107 = vmatprep.subr.mxu0 0.0
    %108 = vmatpush1.msra.mxu0 0.0
    %109 = vmatprep.subr.mxu0 0.0
    %110 = vmatpush1.msra.mxu0 0.0
    %111 = vmatprep.subr.mxu0 0.0
    %112 = vmatpush1.msra.mxu0 0.0
    %113 = vmatprep.subr.mxu0 0.0
    %114 = vmatpush1.msra.mxu0 0.0
    %115 = vmatprep.subr.mxu0 0.0
    %116 = vmatpush1.msra.mxu0 0.0
    %117 = vmatprep.subr.mxu0 0.0
    %118 = vmatpush1.msra.mxu0 0.0
    %119 = vmatprep.subr.mxu0 0.0
    %120 = vmatpush1.msra.mxu0 0.0
    %121 = vmatprep.subr.mxu0 0.0
    %122 = vmatpush1.msra.mxu0 0.0
    %123 = vmatprep.subr.mxu0 0.0
    %124 = vmatpush1.msra.mxu0 0.0
    %125 = vmatprep.subr.mxu0 0.0
    %126 = vmatpush1.msra.mxu0 0.0
    %127 = vmatprep.subr.mxu0 0.0
    %128 = vmatpush1.msra.mxu0 0.0
    %129 = vmatprep.mubr.f32.mxu0 0.0
    %130 = vmatmul.mubr.f32.gmra.mrb[0].mxu0 %v57
    %v131 = vpop.f32.mrb[0].mxu0
    %v132 = vadd.f32 %v49, %v131
    %v133 = vpop.f32.mrb[0].mxu0
    %134 = vmatprep.mubr.f32.mxu0 0.0
    %135 = vmatmul.mubr.f32.gmra.mrb[0].mxu0 %v60
    %v136 = vpop.f32.mrb[0].mxu0
    %v137 = vadd.f32 %v49, %v136
    %v138 = vpop.f32.mrb[0].mxu0
    %139 = vmatprep.mubr.f32.mxu0 0.0
    %140 = vmatmul.mubr.f32.gmra.mrb[0].mxu0 %v63
    %v141 = vpop.f32.mrb[0].mxu0
    %v142 = vadd.f32 %v49, %v141
    %v143 = vpop.f32.mrb[0].mxu0
    %144 = vdwg.mxu0
    %146 = vrot.lane.b32.xlu0 %v137, 96
    %v147 = vpop.permute.xlu0 %146
    %v149 = vsel %vm55, %v132, 0
    %v151 = vsel %vm55, %v147, 0
    %153 = vmatprep.subr.mxu0 0.0
    %154 = vmatpush1.xpose.msra.mxu0 %v151
    %155 = vmatprep.subr.mxu0 0.0
    %156 = vmatpush1.xpose.msra.mxu0 0.0
    %157 = vmatprep.subr.mxu0 0.0
    %158 = vmatpush1.xpose.msra.mxu0 0.0
    %159 = vmatprep.subr.mxu0 0.0
    %160 = vmatpush1.xpose.msra.mxu0 0.0
    %161 = vmatprep.subr.mxu0 0.0
    %162 = vmatpush1.xpose.msra.mxu0 0.0
    %163 = vmatprep.subr.mxu0 0.0
    %164 = vmatpush1.xpose.msra.mxu0 0.0
    %165 = vmatprep.subr.mxu0 0.0
    %166 = vmatpush1.xpose.msra.mxu0 0.0
    %167 = vmatprep.subr.mxu0 0.0
    %168 = vmatpush1.xpose.msra.mxu0 0.0
    %169 = vmatprep.subr.mxu0 0.0
    %170 = vmatpush1.xpose.msra.mxu0 0.0
    %171 = vmatprep.subr.mxu0 0.0
    %172 = vmatpush1.xpose.msra.mxu0 0.0
    %173 = vmatprep.subr.mxu0 0.0
    %174 = vmatpush1.xpose.msra.mxu0 0.0
    %175 = vmatprep.subr.mxu0 0.0
    %176 = vmatpush1.xpose.msra.mxu0 0.0
    %177 = vmatprep.subr.mxu0 0.0
    %178 = vmatpush1.xpose.msra.mxu0 0.0
    %179 = vmatprep.subr.mxu0 0.0
    %180 = vmatpush1.xpose.msra.mxu0 0.0
    %181 = vmatprep.subr.mxu0 0.0
    %182 = vmatpush1.xpose.msra.mxu0 0.0
    %183 = vmatprep.subr.mxu0 0.0
    %184 = vmatpush1.xpose.msra.mxu0 0.0
    %185 = vmatprep.subr.mxu0 0.0
    %186 = vmatpush1.xpose.msra.mxu0 0.0
    %187 = vmatprep.subr.mxu0 0.0
    %188 = vmatpush1.xpose.msra.mxu0 0.0
    %189 = vmatprep.subr.mxu0 0.0
    %190 = vmatpush1.xpose.msra.mxu0 0.0
    %191 = vmatprep.subr.mxu0 0.0
    %192 = vmatpush1.xpose.msra.mxu0 0.0
    %193 = vmatprep.subr.mxu0 0.0
    %194 = vmatpush1.xpose.msra.mxu0 0.0
    %195 = vmatprep.subr.mxu0 0.0
    %196 = vmatpush1.xpose.msra.mxu0 0.0
    %197 = vmatprep.subr.mxu0 0.0
    %198 = vmatpush1.xpose.msra.mxu0 0.0
    %199 = vmatprep.subr.mxu0 0.0
    %200 = vmatpush1.xpose.msra.mxu0 0.0
    %201 = vmatprep.subr.mxu0 0.0
    %202 = vmatpush1.xpose.msra.mxu0 0.0
    %203 = vmatprep.subr.mxu0 0.0
    %204 = vmatpush1.xpose.msra.mxu0 0.0
    %205 = vmatprep.subr.mxu0 0.0
    %206 = vmatpush1.xpose.msra.mxu0 0.0
    %207 = vmatprep.subr.mxu0 0.0
    %208 = vmatpush1.xpose.msra.mxu0 0.0
    %209 = vmatprep.subr.mxu0 0.0
    %210 = vmatpush1.xpose.msra.mxu0 0.0
    %211 = vmatprep.subr.mxu0 0.0
    %212 = vmatpush1.xpose.msra.mxu0 0.0
    %213 = vmatprep.subr.mxu0 0.0
    %214 = vmatpush1.xpose.msra.mxu0 0.0
    %215 = vmatprep.subr.mxu0 0.0
    %216 = vmatpush1.xpose.msra.mxu0 0.0
    %217 = vmatprep.mubr.f32.mxu0 0.0
    %218 = vmatmul.mubr.f32.gmra.mrb[0].mxu0 %v149
    %v219 = vpop.f32.mrb[0].mxu0
    %v220 = vadd.f32 0.0, %v219
    %v221 = vpop.f32.mrb[0].mxu0
    %222 = vdwg.mxu0
    %vm223 = vcmask 64512
    %v224 = vsel %vm223, %v220, -inf
    %225 = vmax.xlane.f32.xlu0 %v224
    %v226 = vpop.xlane.xlu0 %225
    %v227 = vsub.f32 %v220, %v226
    %v228 = vmul.f32 %v227, 1.442695
    %v229 = vpow.pop %v228
    %v230 = vsel %vm223, %v229, 0.0
    %231 = vadd.xlane.f32.xlu0 %v230
    %v232 = vpop.xlane.xlu0 %231
    %v233 = vrcp.pop %v232
    %v234 = vmul.f32 %v232, %v233
    %v235 = vsub.f32 2.0, %v234
    %v236 = vmul.f32 %v233, %v235
    %v237 = vmul.f32 %v229, %v236
    %238 = vrot.lane.b32.xlu0 %v137, 64
    %v239 = vpop.permute.xlu0 %238
    %v242 = vsel %vm223, %v237, 0
    %244 = vmatprep.subr.mxu0 0.0
    %245 = vmatpush1.msra.mxu0 %v239
    %246 = vmatprep.subr.mxu0 0.0
    %247 = vmatpush1.msra.mxu0 0.0
    %248 = vmatprep.subr.mxu0 0.0
    %249 = vmatpush1.msra.mxu0 0.0
    %250 = vmatprep.subr.mxu0 0.0
    %251 = vmatpush1.msra.mxu0 0.0
    %252 = vmatprep.subr.mxu0 0.0
    %253 = vmatpush1.msra.mxu0 0.0
    %254 = vmatprep.subr.mxu0 0.0
    %255 = vmatpush1.msra.mxu0 0.0
    %256 = vmatprep.subr.mxu0 0.0
    %257 = vmatpush1.msra.mxu0 0.0
    %258 = vmatprep.subr.mxu0 0.0
    %259 = vmatpush1.msra.mxu0 0.0
    %260 = vmatprep.subr.mxu0 0.0
    %261 = vmatpush1.msra.mxu0 0.0
    %262 = vmatprep.subr.mxu0 0.0
    %263 = vmatpush1.msra.mxu0 0.0
    %264 = vmatprep.subr.mxu0 0.0
    %265 = vmatpush1.msra.mxu0 0.0
    %266 = vmatprep.subr.mxu0 0.0
    %267 = vmatpush1.msra.mxu0 0.0
    %268 = vmatprep.subr.mxu0 0.0
    %269 = vmatpush1.msra.mxu0 0.0
    %270 = vmatprep.subr.mxu0 0.0
    %271 = vmatpush1.msra.mxu0 0.0
    %272 = vmatprep.subr.mxu0 0.0
    %273 = vmatpush1.msra.mxu0 0.0
    %274 = vmatprep.subr.mxu0 0.0
    %275 = vmatpush1.msra.mxu0 0.0
    %276 = vmatprep.subr.mxu0 0.0
    %277 = vmatpush1.msra.mxu0 0.0
    %278 = vmatprep.subr.mxu0 0.0
    %279 = vmatpush1.msra.mxu0 0.0
    %280 = vmatprep.subr.mxu0 0.0
    %281 = vmatpush1.msra.mxu0 0.0
    %282 = vmatprep.subr.mxu0 0.0
    %283 = vmatpush1.msra.mxu0 0.0
    %284 = vmatprep.subr.mxu0 0.0
    %285 = vmatpush1.msra.mxu0 0.0
    %286 = vmatprep.subr.mxu0 0.0
    %287 = vmatpush1.msra.mxu0 0.0
    %288 = vmatprep.subr.mxu0 0.0
    %289 = vmatpush1.msra.mxu0 0.0
    %290 = vmatprep.subr.mxu0 0.0
    %291 = vmatpush1.msra.mxu0 0.0
    %292 = vmatprep.subr.mxu0 0.0
    %293 = vmatpush1.msra.mxu0 0.0
    %294 = vmatprep.subr.mxu0 0.0
    %295 = vmatpush1.msra.mxu0 0.0
    %296 = vmatprep.subr.mxu0 0.0
    %297 = vmatpush1.msra.mxu0 0.0
    %298 = vmatprep.subr.mxu0 0.0
    %299 = vmatpush1.msra.mxu0 0.0
    %300 = vmatprep.subr.mxu0 0.0
    %301 = vmatpush1.msra.mxu0 0.0
    %302 = vmatprep.subr.mxu0 0.0
    %303 = vmatpush1.msra.mxu0 0.0
    %304 = vmatprep.subr.mxu0 0.0
    %305 = vmatpush1.msra.mxu0 0.0
    %306 = vmatprep.subr.mxu0 0.0
    %307 = vmatpush1.msra.mxu0 0.0
    %308 = vmatprep.mubr.f32.mxu0 0.0
    %309 = vmatmul.mubr.f32.gmra.mrb[0].mxu0 %v242
    %v310 = vpop.f32.mrb[0].mxu0
    %v311 = vadd.f32 0.0, %v310
    %v312 = vpop.f32.mrb[0].mxu0
    %313 = vdwg.mxu0
    %315 = vrot.lane.b32.xlu0 %v142, 96
    %v316 = vpop.permute.xlu0 %315
    %v317 = vsel %vm55, %v137, 0
    %v319 = vsel %vm55, %v316, 0
    %321 = vmatprep.subr.mxu0 0.0
    %322 = vmatpush1.xpose.msra.mxu0 %v319
    %323 = vmatprep.subr.mxu0 0.0
    %324 = vmatpush1.xpose.msra.mxu0 0.0
    %325 = vmatprep.subr.mxu0 0.0
    %326 = vmatpush1.xpose.msra.mxu0 0.0
    %327 = vmatprep.subr.mxu0 0.0
    %328 = vmatpush1.xpose.msra.mxu0 0.0
    %329 = vmatprep.subr.mxu0 0.0
    %330 = vmatpush1.xpose.msra.mxu0 0.0
    %331 = vmatprep.subr.mxu0 0.0
    %332 = vmatpush1.xpose.msra.mxu0 0.0
    %333 = vmatprep.subr.mxu0 0.0
    %334 = vmatpush1.xpose.msra.mxu0 0.0
    %335 = vmatprep.subr.mxu0 0.0
    %336 = vmatpush1.xpose.msra.mxu0 0.0
    %337 = vmatprep.subr.mxu0 0.0
    %338 = vmatpush1.xpose.msra.mxu0 0.0
    %339 = vmatprep.subr.mxu0 0.0
    %340 = vmatpush1.xpose.msra.mxu0 0.0
    %341 = vmatprep.subr.mxu0 0.0
    %342 = vmatpush1.xpose.msra.mxu0 0.0
    %343 = vmatprep.subr.mxu0 0.0
    %344 = vmatpush1.xpose.msra.mxu0 0.0
    %345 = vmatprep.subr.mxu0 0.0
    %346 = vmatpush1.xpose.msra.mxu0 0.0
    %347 = vmatprep.subr.mxu0 0.0
    %348 = vmatpush1.xpose.msra.mxu0 0.0
    %349 = vmatprep.subr.mxu0 0.0
    %350 = vmatpush1.xpose.msra.mxu0 0.0
    %351 = vmatprep.subr.mxu0 0.0
    %352 = vmatpush1.xpose.msra.mxu0 0.0
    %353 = vmatprep.subr.mxu0 0.0
    %354 = vmatpush1.xpose.msra.mxu0 0.0
    %355 = vmatprep.subr.mxu0 0.0
    %356 = vmatpush1.xpose.msra.mxu0 0.0
    %357 = vmatprep.subr.mxu0 0.0
    %358 = vmatpush1.xpose.msra.mxu0 0.0
    %359 = vmatprep.subr.mxu0 0.0
    %360 = vmatpush1.xpose.msra.mxu0 0.0
    %361 = vmatprep.subr.mxu0 0.0
    %362 = vmatpush1.xpose.msra.mxu0 0.0
    %363 = vmatprep.subr.mxu0 0.0
    %364 = vmatpush1.xpose.msra.mxu0 0.0
    %365 = vmatprep.subr.mxu0 0.0
    %366 = vmatpush1.xpose.msra.mxu0 0.0
    %367 = vmatprep.subr.mxu0 0.0
    %368 = vmatpush1.xpose.msra.mxu0 0.0
    %369 = vmatprep.subr.mxu0 0.0
    %370 = vmatpush1.xpose.msra.mxu0 0.0
    %371 = vmatprep.subr.mxu0 0.0
    %372 = vmatpush1.xpose.msra.mxu0 0.0
    %373 = vmatprep.subr.mxu0 0.0
    %374 = vmatpush1.xpose.msra.mxu0 0.0
    %375 = vmatprep.subr.mxu0 0.0
    %376 = vmatpush1.xpose.msra.mxu0 0.0
    %377 = vmatprep.subr.mxu0 0.0
    %378 = vmatpush1.xpose.msra.mxu0 0.0
    %379 = vmatprep.subr.mxu0 0.0
    %380 = vmatpush1.xpose.msra.mxu0 0.0
    %381 = vmatprep.subr.mxu0 0.0
    %382 = vmatpush1.xpose.msra.mxu0 0.0
    %383 = vmatprep.subr.mxu0 0.0
    %384 = vmatpush1.xpose.msra.mxu0 0.0
    %385 = vmatprep.mubr.f32.mxu0 0.0
    %386 = vmatmul.mubr.f32.gmra.mrb[0].mxu0 %v317
    %v387 = vpop.f32.mrb[0].mxu0
    %v388 = vadd.f32 0.0, %v387
    %v389 = vpop.f32.mrb[0].mxu0
    %390 = vdwg.mxu0
    %v391 = vsel %vm223, %v388, -inf
    %392 = vmax.xlane.f32.xlu0 %v391
    %v393 = vpop.xlane.xlu0 %392
    %v394 = vsub.f32 %v388, %v393
    %v395 = vmul.f32 %v394, 1.442695
    %v396 = vpow.pop %v395
    %v397 = vsel %vm223, %v396, 0.0
    %398 = vadd.xlane.f32.xlu0 %v397
    %v399 = vpop.xlane.xlu0 %398
    %v400 = vrcp.pop %v399
    %v401 = vmul.f32 %v399, %v400
    %v402 = vsub.f32 2.0, %v401
    %v403 = vmul.f32 %v400, %v402
    %v404 = vmul.f32 %v396, %v403
    %405 = vrot.lane.b32.xlu0 %v142, 64
    %v406 = vpop.permute.xlu0 %405
    %v409 = vsel %vm223, %v404, 0
    %411 = vmatprep.subr.mxu0 0.0
    %412 = vmatpush1.msra.mxu0 %v406
    %413 = vmatprep.subr.mxu0 0.0
    %414 = vmatpush1.msra.mxu0 0.0
    %415 = vmatprep.subr.mxu0 0.0
    %416 = vmatpush1.msra.mxu0 0.0
    %417 = vmatprep.subr.mxu0 0.0
    %418 = vmatpush1.msra.mxu0 0.0
    %419 = vmatprep.subr.mxu0 0.0
    %420 = vmatpush1.msra.mxu0 0.0
    %421 = vmatprep.subr.mxu0 0.0
    %422 = vmatpush1.msra.mxu0 0.0
    %423 = vmatprep.subr.mxu0 0.0
    %424 = vmatpush1.msra.mxu0 0.0
    %425 = vmatprep.subr.mxu0 0.0
    %426 = vmatpush1.msra.mxu0 0.0
    %427 = vmatprep.subr.mxu0 0.0
    %428 = vmatpush1.msra.mxu0 0.0
    %429 = vmatprep.subr.mxu0 0.0
    %430 = vmatpush1.msra.mxu0 0.0
    %431 = vmatprep.subr.mxu0 0.0
    %432 = vmatpush1.msra.mxu0 0.0
    %433 = vmatprep.subr.mxu0 0.0
    %434 = vmatpush1.msra.mxu0 0.0
    %435 = vmatprep.subr.mxu0 0.0
    %436 = vmatpush1.msra.mxu0 0.0
    %437 = vmatprep.subr.mxu0 0.0
    %438 = vmatpush1.msra.mxu0 0.0
    %439 = vmatprep.subr.mxu0 0.0
    %440 = vmatpush1.msra.mxu0 0.0
    %441 = vmatprep.subr.mxu0 0.0
    %442 = vmatpush1.msra.mxu0 0.0
    %443 = vmatprep.subr.mxu0 0.0
    %444 = vmatpush1.msra.mxu0 0.0
    %445 = vmatprep.subr.mxu0 0.0
    %446 = vmatpush1.msra.mxu0 0.0
    %447 = vmatprep.subr.mxu0 0.0
    %448 = vmatpush1.msra.mxu0 0.0
    %449 = vmatprep.subr.mxu0 0.0
    %450 = vmatpush1.msra.mxu0 0.0
    %451 = vmatprep.subr.mxu0 0.0
    %452 = vmatpush1.msra.mxu0 0.0
    %453 = vmatprep.subr.mxu0 0.0
    %454 = vmatpush1.msra.mxu0 0.0
    %455 = vmatprep.subr.mxu0 0.0
    %456 = vmatpush1.msra.mxu0 0.0
    %457 = vmatprep.subr.mxu0 0.0
    %458 = vmatpush1.msra.mxu0 0.0
    %459 = vmatprep.subr.mxu0 0.0
    %460 = vmatpush1.msra.mxu0 0.0
    %461 = vmatprep.subr.mxu0 0.0
    %462 = vmatpush1.msra.mxu0 0.0
    %463 = vmatprep.subr.mxu0 0.0
    %464 = vmatpush1.msra.mxu0 0.0
    %465 = vmatprep.subr.mxu0 0.0
    %466 = vmatpush1.msra.mxu0 0.0
    %467 = vmatprep.subr.mxu0 0.0
    %468 = vmatpush1.msra.mxu0 0.0
    %469 = vmatprep.subr.mxu0 0.0
    %470 = vmatpush1.msra.mxu0 0.0
    %471 = vmatprep.subr.mxu0 0.0
    %472 = vmatpush1.msra.mxu0 0.0
    %473 = vmatprep.subr.mxu0 0.0
    %474 = vmatpush1.msra.mxu0 0.0
    %475 = vmatprep.mubr.f32.mxu0 0.0
    %476 = vmatmul.mubr.f32.gmra.mrb[0].mxu0 %v409
    %v477 = vpop.f32.mrb[0].mxu0
    %v478 = vadd.f32 0.0, %v477
    %v479 = vpop.f32.mrb[0].mxu0
    %480 = vdwg.mxu0
    %481 = vrot.lane.b32.xlu0 %v132, 96
    %v482 = vpop.permute.xlu0 %481
    %v483 = vsel %vm55, %v142, 0
    %v485 = vsel %vm55, %v482, 0
    %487 = vmatprep.subr.mxu0 0.0
    %488 = vmatpush1.xpose.msra.mxu0 %v485
    %489 = vmatprep.subr.mxu0 0.0
    %490 = vmatpush1.xpose.msra.mxu0 0.0
    %491 = vmatprep.subr.mxu0 0.0
    %492 = vmatpush1.xpose.msra.mxu0 0.0
    %493 = vmatprep.subr.mxu0 0.0
    %494 = vmatpush1.xpose.msra.mxu0 0.0
    %495 = vmatprep.subr.mxu0 0.0
    %496 = vmatpush1.xpose.msra.mxu0 0.0
    %497 = vmatprep.subr.mxu0 0.0
    %498 = vmatpush1.xpose.msra.mxu0 0.0
    %499 = vmatprep.subr.mxu0 0.0
    %500 = vmatpush1.xpose.msra.mxu0 0.0
    %501 = vmatprep.subr.mxu0 0.0
    %502 = vmatpush1.xpose.msra.mxu0 0.0
    %503 = vmatprep.subr.mxu0 0.0
    %504 = vmatpush1.xpose.msra.mxu0 0.0
    %505 = vmatprep.subr.mxu0 0.0
    %506 = vmatpush1.xpose.msra.mxu0 0.0
    %507 = vmatprep.subr.mxu0 0.0
    %508 = vmatpush1.xpose.msra.mxu0 0.0
    %509 = vmatprep.subr.mxu0 0.0
    %510 = vmatpush1.xpose.msra.mxu0 0.0
    %511 = vmatprep.subr.mxu0 0.0
    %512 = vmatpush1.xpose.msra.mxu0 0.0
    %513 = vmatprep.subr.mxu0 0.0
    %514 = vmatpush1.xpose.msra.mxu0 0.0
    %515 = vmatprep.subr.mxu0 0.0
    %516 = vmatpush1.xpose.msra.mxu0 0.0
    %517 = vmatprep.subr.mxu0 0.0
    %518 = vmatpush1.xpose.msra.mxu0 0.0
    %519 = vmatprep.subr.mxu0 0.0
    %520 = vmatpush1.xpose.msra.mxu0 0.0
    %521 = vmatprep.subr.mxu0 0.0
    %522 = vmatpush1.xpose.msra.mxu0 0.0
    %523 = vmatprep.subr.mxu0 0.0
    %524 = vmatpush1.xpose.msra.mxu0 0.0
    %525 = vmatprep.subr.mxu0 0.0
    %526 = vmatpush1.xpose.msra.mxu0 0.0
    %527 = vmatprep.subr.mxu0 0.0
    %528 = vmatpush1.xpose.msra.mxu0 0.0
    %529 = vmatprep.subr.mxu0 0.0
    %530 = vmatpush1.xpose.msra.mxu0 0.0
    %531 = vmatprep.subr.mxu0 0.0
    %532 = vmatpush1.xpose.msra.mxu0 0.0
    %533 = vmatprep.subr.mxu0 0.0
    %534 = vmatpush1.xpose.msra.mxu0 0.0
    %535 = vmatprep.subr.mxu0 0.0
    %536 = vmatpush1.xpose.msra.mxu0 0.0
    %537 = vmatprep.subr.mxu0 0.0
    %538 = vmatpush1.xpose.msra.mxu0 0.0
    %539 = vmatprep.subr.mxu0 0.0
    %540 = vmatpush1.xpose.msra.mxu0 0.0
    %541 = vmatprep.subr.mxu0 0.0
    %542 = vmatpush1.xpose.msra.mxu0 0.0
    %543 = vmatprep.subr.mxu0 0.0
    %544 = vmatpush1.xpose.msra.mxu0 0.0
    %545 = vmatprep.subr.mxu0 0.0
    %546 = vmatpush1.xpose.msra.mxu0 0.0
    %547 = vmatprep.subr.mxu0 0.0
    %548 = vmatpush1.xpose.msra.mxu0 0.0
    %549 = vmatprep.subr.mxu0 0.0
    %550 = vmatpush1.xpose.msra.mxu0 0.0
    %551 = vmatprep.mubr.f32.mxu0 0.0
    %552 = vmatmul.mubr.f32.gmra.mrb[0].mxu0 %v483
    %v553 = vpop.f32.mrb[0].mxu0
    %v554 = vadd.f32 0.0, %v553
    %v555 = vpop.f32.mrb[0].mxu0
    %556 = vdwg.mxu0
    %v557 = vsel %vm223, %v554, -inf
    %558 = vmax.xlane.f32.xlu0 %v557
    %v559 = vpop.xlane.xlu0 %558
    %v560 = vsub.f32 %v554, %v559
    %v561 = vmul.f32 %v560, 1.442695
    %v562 = vpow.pop %v561
    %v563 = vsel %vm223, %v562, 0.0
    %564 = vadd.xlane.f32.xlu0 %v563
    %v565 = vpop.xlane.xlu0 %564
    %v566 = vrcp.pop %v565
    %v567 = vmul.f32 %v565, %v566
    %v568 = vsub.f32 2.0, %v567
    %v569 = vmul.f32 %v566, %v568
    %v570 = vmul.f32 %v562, %v569
    %571 = vrot.lane.b32.xlu0 %v132, 64
    %v572 = vpop.permute.xlu0 %571
    %v575 = vsel %vm223, %v570, 0
    %577 = vmatprep.subr.mxu0 0.0
    %578 = vmatpush1.msra.mxu0 %v572
    %579 = vmatprep.subr.mxu0 0.0
    %580 = vmatpush1.msra.mxu0 0.0
    %581 = vmatprep.subr.mxu0 0.0
    %582 = vmatpush1.msra.mxu0 0.0
    %583 = vmatprep.subr.mxu0 0.0
    %584 = vmatpush1.msra.mxu0 0.0
    %585 = vmatprep.subr.mxu0 0.0
    %586 = vmatpush1.msra.mxu0 0.0
    %587 = vmatprep.subr.mxu0 0.0
    %588 = vmatpush1.msra.mxu0 0.0
    %589 = vmatprep.subr.mxu0 0.0
    %590 = vmatpush1.msra.mxu0 0.0
    %591 = vmatprep.subr.mxu0 0.0
    %592 = vmatpush1.msra.mxu0 0.0
    %593 = vmatprep.subr.mxu0 0.0
    %594 = vmatpush1.msra.mxu0 0.0
    %595 = vmatprep.subr.mxu0 0.0
    %596 = vmatpush1.msra.mxu0 0.0
    %597 = vmatprep.subr.mxu0 0.0
    %598 = vmatpush1.msra.mxu0 0.0
    %599 = vmatprep.subr.mxu0 0.0
    %600 = vmatpush1.msra.mxu0 0.0
    %601 = vmatprep.subr.mxu0 0.0
    %602 = vmatpush1.msra.mxu0 0.0
    %603 = vmatprep.subr.mxu0 0.0
    %604 = vmatpush1.msra.mxu0 0.0
    %605 = vmatprep.subr.mxu0 0.0
    %606 = vmatpush1.msra.mxu0 0.0
    %607 = vmatprep.subr.mxu0 0.0
    %608 = vmatpush1.msra.mxu0 0.0
    %609 = vmatprep.subr.mxu0 0.0
    %610 = vmatpush1.msra.mxu0 0.0
    %611 = vmatprep.subr.mxu0 0.0
    %612 = vmatpush1.msra.mxu0 0.0
    %613 = vmatprep.subr.mxu0 0.0
    %614 = vmatpush1.msra.mxu0 0.0
    %615 = vmatprep.subr.mxu0 0.0
    %616 = vmatpush1.msra.mxu0 0.0
    %617 = vmatprep.subr.mxu0 0.0
    %618 = vmatpush1.msra.mxu0 0.0
    %619 = vmatprep.subr.mxu0 0.0
    %620 = vmatpush1.msra.mxu0 0.0
    %621 = vmatprep.subr.mxu0 0.0
    %622 = vmatpush1.msra.mxu0 0.0
    %623 = vmatprep.subr.mxu0 0.0
    %624 = vmatpush1.msra.mxu0 0.0
    %625 = vmatprep.subr.mxu0 0.0
    %626 = vmatpush1.msra.mxu0 0.0
    %627 = vmatprep.subr.mxu0 0.0
    %628 = vmatpush1.msra.mxu0 0.0
    %629 = vmatprep.subr.mxu0 0.0
    %630 = vmatpush1.msra.mxu0 0.0
    %631 = vmatprep.subr.mxu0 0.0
    %632 = vmatpush1.msra.mxu0 0.0
    %633 = vmatprep.subr.mxu0 0.0
    %634 = vmatpush1.msra.mxu0 0.0
    %635 = vmatprep.subr.mxu0 0.0
    %636 = vmatpush1.msra.mxu0 0.0
    %637 = vmatprep.subr.mxu0 0.0
    %638 = vmatpush1.msra.mxu0 0.0
    %639 = vmatprep.subr.mxu0 0.0
    %640 = vmatpush1.msra.mxu0 0.0
    %641 = vmatprep.mubr.f32.mxu0 0.0
    %642 = vmatmul.mubr.f32.gmra.mrb[0].mxu0 %v575
    %v643 = vpop.f32.mrb[0].mxu0
    %v644 = vadd.f32 0.0, %v643
    %v645 = vpop.f32.mrb[0].mxu0
    %646 = vdwg.mxu0
    %v648 = vlaneseq
    %v649 = vshrl.u32 %v648, 7
    %v650 = vsub.s32 0, %v649
    %v651 = vrot.slane %v46, %v650
    %v652 = vlaneseq
    %v653 = vshrl.u32 %v652, 7
    %v654 = vsub.s32 1, %v653
    %v655 = vrot.slane %v46, %v654
    %v656 = vlaneseq
    %v657 = vshrl.u32 %v656, 7
    %v658 = vsub.s32 2, %v657
    %v659 = vrot.slane %v46, %v658
    %v660 = vlaneseq
    %v661 = vshrl.u32 %v660, 7
    %v662 = vsub.s32 3, %v661
    %v663 = vrot.slane %v46, %v662
    %v669 = vsel %vm55, %v311, 0
    %v672 = vsel %vm55, %v478, 0
    %v675 = vsel %vm55, %v644, 0
    %677 = vmatprep.subr.mxu0 %v30
    %678 = vmatpush1.msra.mxu0 %v29
    %679 = vmatprep.subr.mxu0 %v34
    %680 = vmatpush1.msra.mxu0 %v33
    %681 = vmatprep.subr.mxu0 %v38
    %682 = vmatpush1.msra.mxu0 %v37
    %683 = vmatprep.subr.mxu0 %v42
    %684 = vmatpush1.msra.mxu0 %v41
    %685 = vmatprep.subr.mxu0 0.0
    %686 = vmatpush1.msra.mxu0 0.0
    %687 = vmatprep.subr.mxu0 0.0
    %688 = vmatpush1.msra.mxu0 0.0
    %689 = vmatprep.subr.mxu0 0.0
    %690 = vmatpush1.msra.mxu0 0.0
    %691 = vmatprep.subr.mxu0 0.0
    %692 = vmatpush1.msra.mxu0 0.0
    %693 = vmatprep.subr.mxu0 0.0
    %694 = vmatpush1.msra.mxu0 0.0
    %695 = vmatprep.subr.mxu0 0.0
    %696 = vmatpush1.msra.mxu0 0.0
    %697 = vmatprep.subr.mxu0 0.0
    %698 = vmatpush1.msra.mxu0 0.0
    %699 = vmatprep.subr.mxu0 0.0
    %700 = vmatpush1.msra.mxu0 0.0
    %701 = vmatprep.subr.mxu0 0.0
    %702 = vmatpush1.msra.mxu0 0.0
    %703 = vmatprep.subr.mxu0 0.0
    %704 = vmatpush1.msra.mxu0 0.0
    %705 = vmatprep.subr.mxu0 0.0
    %706 = vmatpush1.msra.mxu0 0.0
    %707 = vmatprep.subr.mxu0 0.0
    %708 = vmatpush1.msra.mxu0 0.0
    %709 = vmatprep.subr.mxu0 0.0
    %710 = vmatpush1.msra.mxu0 0.0
    %711 = vmatprep.subr.mxu0 0.0
    %712 = vmatpush1.msra.mxu0 0.0
    %713 = vmatprep.subr.mxu0 0.0
    %714 = vmatpush1.msra.mxu0 0.0
    %715 = vmatprep.subr.mxu0 0.0
    %716 = vmatpush1.msra.mxu0 0.0
    %717 = vmatprep.subr.mxu0 0.0
    %718 = vmatpush1.msra.mxu0 0.0
    %719 = vmatprep.subr.mxu0 0.0
    %720 = vmatpush1.msra.mxu0 0.0
    %721 = vmatprep.subr.mxu0 0.0
    %722 = vmatpush1.msra.mxu0 0.0
    %723 = vmatprep.subr.mxu0 0.0
    %724 = vmatpush1.msra.mxu0 0.0
    %725 = vmatprep.subr.mxu0 0.0
    %726 = vmatpush1.msra.mxu0 0.0
    %727 = vmatprep.subr.mxu0 0.0
    %728 = vmatpush1.msra.mxu0 0.0
    %729 = vmatprep.subr.mxu0 0.0
    %730 = vmatpush1.msra.mxu0 0.0
    %731 = vmatprep.subr.mxu0 0.0
    %732 = vmatpush1.msra.mxu0 0.0
    %733 = vmatprep.subr.mxu0 0.0
    %734 = vmatpush1.msra.mxu0 0.0
    %735 = vmatprep.subr.mxu0 0.0
    %736 = vmatpush1.msra.mxu0 0.0
    %737 = vmatprep.subr.mxu0 0.0
    %738 = vmatpush1.msra.mxu0 0.0
    %739 = vmatprep.subr.mxu0 0.0
    %740 = vmatpush1.msra.mxu0 0.0
    %741 = vmatprep.mubr.f32.mxu0 0.0
    %742 = vmatmul.mubr.f32.gmra.mrb[0].mxu0 %v669
    %v743 = vpop.f32.mrb[0].mxu0
    %v744 = vadd.f32 %v651, %v743
    %v745 = vpop.f32.mrb[0].mxu0
    %v746 = vadd.f32 %v655, %v745
    %747 = vmatprep.mubr.f32.mxu0 0.0
    %748 = vmatmul.mubr.f32.gmra.mrb[0].mxu0 %v672
    %v749 = vpop.f32.mrb[0].mxu0
    %v750 = vadd.f32 %v651, %v749
    %v751 = vpop.f32.mrb[0].mxu0
    %v752 = vadd.f32 %v655, %v751
    %753 = vmatprep.mubr.f32.mxu0 0.0
    %754 = vmatmul.mubr.f32.gmra.mrb[0].mxu0 %v675
    %v755 = vpop.f32.mrb[0].mxu0
    %v756 = vadd.f32 %v651, %v755
    %v757 = vpop.f32.mrb[0].mxu0
    %v758 = vadd.f32 %v655, %v757
    %759 = vdwg.mxu0
    %760 = vmatprep.subr.mxu0 %v32
    %761 = vmatpush1.msra.mxu0 %v31
    %762 = vmatprep.subr.mxu0 %v36
    %763 = vmatpush1.msra.mxu0 %v35
    %764 = vmatprep.subr.mxu0 %v40
    %765 = vmatpush1.msra.mxu0 %v39
    %766 = vmatprep.subr.mxu0 %v44
    %767 = vmatpush1.msra.mxu0 %v43
    %768 = vmatprep.subr.mxu0 0.0
    %769 = vmatpush1.msra.mxu0 0.0
    %770 = vmatprep.subr.mxu0 0.0
    %771 = vmatpush1.msra.mxu0 0.0
    %772 = vmatprep.subr.mxu0 0.0
    %773 = vmatpush1.msra.mxu0 0.0
    %774 = vmatprep.subr.mxu0 0.0
    %775 = vmatpush1.msra.mxu0 0.0
    %776 = vmatprep.subr.mxu0 0.0
    %777 = vmatpush1.msra.mxu0 0.0
    %778 = vmatprep.subr.mxu0 0.0
    %779 = vmatpush1.msra.mxu0 0.0
    %780 = vmatprep.subr.mxu0 0.0
    %781 = vmatpush1.msra.mxu0 0.0
    %782 = vmatprep.subr.mxu0 0.0
    %783 = vmatpush1.msra.mxu0 0.0
    %784 = vmatprep.subr.mxu0 0.0
    %785 = vmatpush1.msra.mxu0 0.0
    %786 = vmatprep.subr.mxu0 0.0
    %787 = vmatpush1.msra.mxu0 0.0
    %788 = vmatprep.subr.mxu0 0.0
    %789 = vmatpush1.msra.mxu0 0.0
    %790 = vmatprep.subr.mxu0 0.0
    %791 = vmatpush1.msra.mxu0 0.0
    %792 = vmatprep.subr.mxu0 0.0
    %793 = vmatpush1.msra.mxu0 0.0
    %794 = vmatprep.subr.mxu0 0.0
    %795 = vmatpush1.msra.mxu0 0.0
    %796 = vmatprep.subr.mxu0 0.0
    %797 = vmatpush1.msra.mxu0 0.0
    %798 = vmatprep.subr.mxu0 0.0
    %799 = vmatpush1.msra.mxu0 0.0
    %800 = vmatprep.subr.mxu0 0.0
    %801 = vmatpush1.msra.mxu0 0.0
    %802 = vmatprep.subr.mxu0 0.0
    %803 = vmatpush1.msra.mxu0 0.0
    %804 = vmatprep.subr.mxu0 0.0
    %805 = vmatpush1.msra.mxu0 0.0
    %806 = vmatprep.subr.mxu0 0.0
    %807 = vmatpush1.msra.mxu0 0.0
    %808 = vmatprep.subr.mxu0 0.0
    %809 = vmatpush1.msra.mxu0 0.0
    %810 = vmatprep.subr.mxu0 0.0
    %811 = vmatpush1.msra.mxu0 0.0
    %812 = vmatprep.subr.mxu0 0.0
    %813 = vmatpush1.msra.mxu0 0.0
    %814 = vmatprep.subr.mxu0 0.0
    %815 = vmatpush1.msra.mxu0 0.0
    %816 = vmatprep.subr.mxu0 0.0
    %817 = vmatpush1.msra.mxu0 0.0
    %818 = vmatprep.subr.mxu0 0.0
    %819 = vmatpush1.msra.mxu0 0.0
    %820 = vmatprep.subr.mxu0 0.0
    %821 = vmatpush1.msra.mxu0 0.0
    %822 = vmatprep.subr.mxu0 0.0
    %823 = vmatpush1.msra.mxu0 0.0
    %824 = vmatprep.mubr.f32.mxu0 0.0
    %825 = vmatmul.mubr.f32.gmra.mrb[0].mxu0 %v669
    %v826 = vpop.f32.mrb[0].mxu0
    %v827 = vadd.f32 %v659, %v826
    %v828 = vpop.f32.mrb[0].mxu0
    %v829 = vadd.f32 %v663, %v828
    %830 = vmatprep.mubr.f32.mxu0 0.0
    %831 = vmatmul.mubr.f32.gmra.mrb[0].mxu0 %v672
    %v832 = vpop.f32.mrb[0].mxu0
    %v833 = vadd.f32 %v659, %v832
    %v834 = vpop.f32.mrb[0].mxu0
    %v835 = vadd.f32 %v663, %v834
    %836 = vmatprep.mubr.f32.mxu0 0.0
    %837 = vmatmul.mubr.f32.gmra.mrb[0].mxu0 %v675
    %v838 = vpop.f32.mrb[0].mxu0
    %v839 = vadd.f32 %v659, %v838
    %v840 = vpop.f32.mrb[0].mxu0
    %v841 = vadd.f32 %v663, %v840
    %842 = vdwg.mxu0
    %v843 = vmax.f32 %v744, 0.0
    %v844 = vmax.f32 %v746, 0.0
    %v845 = vmax.f32 %v827, 0.0
    %v846 = vmax.f32 %v829, 0.0
    %v847 = vmax.f32 %v750, 0.0
    %v848 = vmax.f32 %v752, 0.0
    %v849 = vmax.f32 %v833, 0.0
    %v850 = vmax.f32 %v835, 0.0
    %v851 = vmax.f32 %v756, 0.0
    %v852 = vmax.f32 %v758, 0.0
    %v853 = vmax.f32 %v839, 0.0
    %v854 = vmax.f32 %v841, 0.0
    %v856 = vlaneseq
    %v857 = vshrl.u32 %v856, 7
    %v858 = vsub.s32 0, %v857
    %v859 = vrot.slane %v48, %v858
    %v860 = vlaneseq
    %v861 = vshrl.u32 %v860, 7
    %v862 = vsub.s32 1, %v861
    %v863 = vrot.slane %v48, %v862
    %v864 = vlaneseq
    %v865 = vshrl.u32 %v864, 7
    %v866 = vsub.s32 2, %v865
    %v867 = vrot.slane %v48, %v866
    %v868 = vlaneseq
    %v869 = vshrl.u32 %v868, 7
    %v870 = vsub.s32 3, %v869
    %v871 = vrot.slane %v48, %v870
    %v876 = vmul.f32 %v843, %v859
    %v877 = vmul.f32 %v844, %v863
    %v878 = vmul.f32 %v845, %v867
    %v879 = vmul.f32 %v846, %v871
    %v880 = vmul.f32 %v847, %v859
    %v881 = vmul.f32 %v848, %v863
    %v882 = vmul.f32 %v849, %v867
    %v883 = vmul.f32 %v850, %v871
    %v884 = vmul.f32 %v851, %v859
    %v885 = vmul.f32 %v852, %v863
    %v886 = vmul.f32 %v853, %v867
    %v887 = vmul.f32 %v854, %v871
    %v888 = vadd.f32 %v876, %v877
    %v889 = vadd.f32 %v888, %v878
    %v890 = vadd.f32 %v889, %v879
    %891 = vadd.xlane.f32.xlu0 %v890
    %v892 = vpop.xlane.xlu0 %891
    %v893 = vadd.f32 %v880, %v881
    %v894 = vadd.f32 %v893, %v882
    %v895 = vadd.f32 %v894, %v883
    %896 = vadd.xlane.f32.xlu0 %v895
    %v897 = vpop.xlane.xlu0 %896
    %v898 = vadd.f32 %v884, %v885
    %v899 = vadd.f32 %v898, %v886
    %v900 = vadd.f32 %v899, %v887
    %901 = vadd.xlane.f32.xlu0 %v900
    %v902 = vpop.xlane.xlu0 %901
    %v903 = vadd.f32 %v892, %v50
    %v904 = vadd.f32 %v897, %v50
    %v905 = vadd.f32 %v902, %v50
    %v906 = vmax.f32 %v903, %v904
    %v907 = vmax.f32 %v906, %v905
    %v908 = vsub.f32 %v903, %v907
    %v909 = vmul.f32 %v908, 1.442695
    %v910 = vpow.pop %v909
    %v911 = vsub.f32 %v904, %v907
    %v912 = vmul.f32 %v911, 1.442695
    %v913 = vpow.pop %v912
    %v914 = vsub.f32 %v905, %v907
    %v915 = vmul.f32 %v914, 1.442695
    %v916 = vpow.pop %v915
    %v917 = vadd.f32 %v910, %v913
    %v918 = vadd.f32 %v917, %v916
    %v919 = vrcp.pop %v918
    %v920 = vmul.f32 %v918, %v919
    %v921 = vsub.f32 2.0, %v920
    %v922 = vmul.f32 %v919, %v921
    %v923 = vmul.f32 %v910, %v922
    %925 = vset.pattern.permute.xlu0 0
    %926 = vperm.xlu0 %925, %v923
    %v927 = vpop.permute.xlu0 %926
    %v929 = vmul.f32 %v927, %v26
    %v930 = vmul.f32 %v913, %v922
    %932 = vset.pattern.permute.xlu0 0
    %933 = vperm.xlu0 %932, %v930
    %v934 = vpop.permute.xlu0 %933
    %v936 = vmul.f32 %v934, %v27
    %v937 = vadd.f32 %v929, %v936
    %v938 = vmul.f32 %v916, %v922
    %940 = vset.pattern.permute.xlu0 0
    %941 = vperm.xlu0 %940, %v938
    %v942 = vpop.permute.xlu0 %941
    %v944 = vmul.f32 %v942, %v28
    %v945 = vadd.f32 %v937, %v944
    %946 = vst.msk [vmem:[#allocation5] sm:$0xff] %vm55, %v945
    // Predicated region
    $region14: #{attention_module_forward.1} parent=1 // pred_check
      _
    $region15: #{attention_module_forward.1} parent=1 // pred_check_branch
      %948 = sbr.rel (0) target = $region17
    $region16: #{attention_module_forward.1} parent=1 // pred_region
      %s950 = ssub.s32 128, 128
      %951 = vsyncadd [#allocation4], %s950
      %s953 = sshll.u32 [#allocation5], 4
      %s954 = int_to_ptr.vmem [resolvable:$true] %s953
      %956 = dma.vmem_to_hbm [thread:$0]  %s954, 128, %s2, [#allocation4]
    $region17: #{attention_module_forward.1} parent=1 // pred_fallthru
      _
    // Predicated region
    $region18: #{attention_module_forward.1} parent=1 // pred_check
      _
    $region19: #{attention_module_forward.1} parent=1 // pred_check_branch
      %958 = sbr.rel (0) target = $region21
    $region20: #{attention_module_forward.1} parent=1 // pred_region
      %959 = dma.done [#allocation4], 128
    $region21: #{attention_module_forward.1} parent=1 // pred_fallthru
      _
    %960 = vsyncpa [#allocation3], 1
    %961 = vsyncpa [#allocation4], 1

</llo_original>
